<compile_context>
chip_gen: v7x
topology: tpu7x:2x2x1
jax: 0.10.0
libtpu: 0.0.40
codegen_flags: <defaults>
</compile_context>

<pallas_src>
import jax
import jax.numpy as jnp
from jax import lax
from jax.experimental import pallas as pl
from jax.experimental.pallas import tpu as pltpu


# ----------------------------------------------------------------------------
# Fused kernel: conv1 -> BN1 -> ReLU -> conv2 -> BN2 -> ReLU for `nb` images.
# ----------------------------------------------------------------------------
def _decoder_kernel(x_ref, wb1_ref, s1_ref, b1_ref, wb2_ref, s2_ref, b2_ref,
                    out_ref, slab1_ref, slab2_ref):
    """Block shapes (per grid step, nb images):
      x_ref    : (nb, H, W*Cin)         f32   -- NHWC rows, (w, c) fused in lanes, c fastest
      wb1_ref  : (3*W*Cin,  W*Cout)     bf16  -- fused-K banded conv1 weight (W halo folded in)
      s1_ref   : (1, W*Cout)            f32   -- folded BN1 scale, tiled per lane
      b1_ref   : (1, W*Cout)            f32   -- folded BN1 bias (+ conv bias), tiled
      wb2_ref  : (3*W*Cout, W*Cout)     bf16
      s2_ref   : (1, W*Cout)            f32
      b2_ref   : (1, W*Cout)            f32
      out_ref  : (nb, H, W*Cout)        bf16  -- lane-dense output
      slab1_ref: VMEM (nb*H, 3*W*Cin)   bf16  -- lane-concat [x(r-1) | x(r) | x(r+1)]
      slab2_ref: VMEM (nb*H, 3*W*Cout)  bf16  -- same for the VMEM-resident intermediate
    """
    nb, H, K1 = x_ref.shape
    K2 = out_ref.shape[2]
    bdt = slab1_ref.dtype
    zero1 = jnp.zeros((1, K1), bdt)
    zero2 = jnp.zeros((1, K2), bdt)

    # ----- layer 1: build the dy-concatenated slab (this IS the H/W padding) ---
    for b in range(nb):                      # static unroll; nb is tiny
        r0 = b * H
        xb = x_ref[b].astype(bdt)            # single f32->bf16 cast per image
        slab1_ref[r0:r0 + H, K1:2 * K1] = xb                       # dy=1 (center row)
        slab1_ref[r0 + 1:r0 + H, 0:K1] = xb[:H - 1]                # dy=0 (row above)
        slab1_ref[r0:r0 + 1, 0:K1] = zero1                         # top halo row
        slab1_ref[r0:r0 + H - 1, 2 * K1:3 * K1] = xb[1:]           # dy=2 (row below)
        slab1_ref[r0 + H - 1:r0 + H, 2 * K1:3 * K1] = zero1        # bottom halo row

    # one MXU matmul: (nb*H, 3*W*Cin) @ (3*W*Cin, W*Cout), f32 accumulate
    acc1 = jnp.dot(slab1_ref[...], wb1_ref[...], preferred_element_type=jnp.float32)
    y1 = jnp.maximum(acc1 * s1_ref[...] + b1_ref[...], 0.0)        # (nb*H, K2) f32
    y1b = y1.astype(bdt)                                           # single cast

    # ----- layer 2: intermediate stays in VMEM, never touches HBM --------------
    for b in range(nb):
        r0 = b * H
        yb = y1b[r0:r0 + H]
        slab2_ref[r0:r0 + H, K2:2 * K2] = yb
        slab2_ref[r0 + 1:r0 + H, 0:K2] = yb[:H - 1]
        slab2_ref[r0:r0 + 1, 0:K2] = zero2
        slab2_ref[r0:r0 + H - 1, 2 * K2:3 * K2] = yb[1:]
        slab2_ref[r0 + H - 1:r0 + H, 2 * K2:3 * K2] = zero2

    acc2 = jnp.dot(slab2_ref[...], wb2_ref[...], preferred_element_type=jnp.float32)
    y2 = jnp.maximum(acc2 * s2_ref[...] + b2_ref[...], 0.0)        # (nb*H, K2) f32

    for b in range(nb):
        out_ref[b] = y2[b * H:(b + 1) * H].astype(out_ref.dtype)   # full-lane bf16 store


# ----------------------------------------------------------------------------
# Host-side parameter preparation (pure jnp: jittable, no device sync)
# ----------------------------------------------------------------------------
# Lane layout used EVERYWHERE below: channels fastest, i.e. lane = w*C + c.
def banded_conv_weight(w_hwio, width):
    """(3,3,Cin,Cout) HWIO weight -> (3*width*Cin, width*Cout) fused-K band matrix.

    Row index    = dy*width*Cin + xi*Cin + cin   (input column xi, cin fastest)
    Column index =               x *Cout + cout  (output column x, cout fastest)
    Out-of-range dx taps are dropped, which implements the zero W padding.
    """
    kh, kw, cin, cout = w_hwio.shape
    w = w_hwio.astype(jnp.float32)
    bands = []
    for dy in range(kh):
        band = jnp.zeros((width * cin, width * cout), jnp.float32)
        for dx in range(kw):
            # S[xi, x] = 1 iff xi == x + dx - 1  <=>  x - xi == 1 - dx
            shift = jnp.eye(width, k=1 - dx, dtype=jnp.float32)
            band = band + jnp.kron(shift, w[dy, dx])
        bands.append(band)
    return jnp.concatenate(bands, axis=0)


def prepare_kernel_params(w1, s1, b1, w2, s2, b2, width):
    """Fused-K bf16 banded weights + lane-tiled f32 scale/bias."""
    cout = w1.shape[-1]

    def tile_vec(v):  # (Cout,) -> (1, width*Cout) with channels fastest per lane
        return jnp.tile(v.astype(jnp.float32), width).reshape(1, width * cout)

    wb1 = banded_conv_weight(w1, width).astype(jnp.bfloat16)
    wb2 = banded_conv_weight(w2, width).astype(jnp.bfloat16)
    return wb1, tile_vec(s1), tile_vec(b1), wb2, tile_vec(s2), tile_vec(b2)


def init_decoder_params(key, in_channels, out_channels):
    """Deterministic synthetic parameters matching the PyTorch module shapes."""
    ks = jax.random.split(key, 12)
    eps = 1e-5

    def one_layer(keys, cin, cout):
        k_w, k_b, k_g, k_beta, k_m, k_v = keys
        w = 0.1 * jax.random.normal(k_w, (3, 3, cin, cout), dtype=jnp.float32)  # HWIO
        conv_b = 0.1 * jax.random.normal(k_b, (cout,), dtype=jnp.float32)
        gamma = 1.0 + 0.1 * jax.random.normal(k_g, (cout,), dtype=jnp.float32)
        beta = 0.1 * jax.random.normal(k_beta, (cout,), dtype=jnp.float32)
        running_mean = 0.1 * jax.random.normal(k_m, (cout,), dtype=jnp.float32)
        running_var = 1.0 + 0.1 * jax.random.uniform(k_v, (cout,), dtype=jnp.float32)
        # Inference-mode BN + conv bias folded into a per-channel scale/bias.
        scale = gamma / jnp.sqrt(running_var + eps)
        bias = beta + scale * (conv_b - running_mean)
        return w, scale, bias

    w1, s1, b1 = one_layer(ks[0:6], in_channels, out_channels)
    w2, s2, b2 = one_layer(ks[6:12], out_channels, out_channels)
    return (w1, s1, b1), (w2, s2, b2)


# ----------------------------------------------------------------------------
# Forward pass: canonical NHWC entry point (no layout transposes), single
# fused pallas_call.
# ----------------------------------------------------------------------------
@jax.jit
def decoder_forward(x_nhwc, wb1, s1t, b1t, wb2, s2t, b2t):
    N, H, W, Cin = x_nhwc.shape
    K1 = W * Cin
    K2 = s1t.shape[-1]
    Cout = K2 // W

    # Batch folding into the matmul M dimension.  Keep >=2 "parallel" grid steps
    # so both v7x TensorCores stay busy; fold images per step once N allows it.
    if N >= 4 and N % 2 == 0:
        nb = N // 2            # 2 big steps, M = nb*H per matmul
    else:
        nb = 1                 # N<=2 (or odd): 1 image per step
    steps = N // nb

    # NHWC -> (N, H, W*Cin) is a free reshape (channels already fastest).
    x = x_nhwc.astype(jnp.float32).reshape(N, H, K1)

    flops = 2 * N * H * (3 * K1 * K2 + 3 * K2 * K2)
    bytes_accessed = (
        N * H * K1 * 4                      # f32 input
        + wb1.size * 2 + wb2.size * 2       # bf16 fused-K banded weights
        + 4 * K2 * 4                        # scale/bias vectors
        + N * H * K2 * 2                    # bf16 output
    )

    out_flat = pl.pallas_call(
        _decoder_kernel,
        out_shape=jax.ShapeDtypeStruct((N, H, K2), jnp.bfloat16),
        grid_spec=pltpu.PrefetchScalarGridSpec(
            num_scalar_prefetch=0,
            grid=(steps,),
            in_specs=[
                pl.BlockSpec((nb, H, K1), lambda n: (n, 0, 0)),
                # Constant operands (index_map never changes across the grid).
                pl.BlockSpec((3 * K1, K2), lambda n: (0, 0)),
                pl.BlockSpec((1, K2), lambda n: (0, 0)),
                pl.BlockSpec((1, K2), lambda n: (0, 0)),
                pl.BlockSpec((3 * K2, K2), lambda n: (0, 0)),
                pl.BlockSpec((1, K2), lambda n: (0, 0)),
                pl.BlockSpec((1, K2), lambda n: (0, 0)),
            ],
            out_specs=pl.BlockSpec((nb, H, K2), lambda n: (n, 0, 0)),
            scratch_shapes=[
                pltpu.VMEM((nb * H, 3 * K1), jnp.bfloat16),   # layer-1 fused-K slab
                pltpu.VMEM((nb * H, 3 * K2), jnp.bfloat16),   # layer-2 fused-K slab
            ],
        ),
        compiler_params=pltpu.CompilerParams(
            dimension_semantics=("parallel",),
        ),
        cost_estimate=pl.CostEstimate(
            flops=flops, transcendentals=0, bytes_accessed=bytes_accessed),
    )(x, wb1, s1t, b1t, wb2, s2t, b2t)

    # (N, H, W*Cout) -> NHWC is free (channels fastest).
    return out_flat.reshape(N, H, W, Cout)


def decoder_forward_nchw(x_nchw, *kparams):
    """PyTorch-layout adapter.  The two transposes here are full HBM round-trips
    executed by XLA outside the kernel — keep the surrounding model NHWC and use
    `decoder_forward` directly to avoid them."""
    x_nhwc = jnp.transpose(x_nchw, (0, 2, 3, 1))
    out_nhwc = decoder_forward(x_nhwc, *kparams)
    return jnp.transpose(out_nhwc, (0, 3, 1, 2))


# ----------------------------------------------------------------------------
# Plain-JAX reference (NHWC).  mxu_dtype=bf16 mirrors the kernel's MXU operand
# precision; mxu_dtype=f32 matches the original PyTorch module's numerics.
# ----------------------------------------------------------------------------
def _reference_forward(x_nhwc, w1, s1, b1, w2, s2, b2, *, mxu_dtype=jnp.bfloat16):
    def layer(x, w_hwio, scale, bias):
        y = lax.conv_general_dilated(
            x.astype(mxu_dtype), w_hwio.astype(mxu_dtype),
            window_strides=(1, 1), padding="SAME",
            dimension_numbers=("NHWC", "HWIO", "NHWC"),
            preferred_element_type=jnp.float32)
        y = y * scale[None, None, None, :] + bias[None, None, None, :]
        return jnp.maximum(y, 0.0)

    y = layer(x_nhwc.astype(jnp.float32), w1, s1, b1)
    return layer(y, w2, s2, b2)


if __name__ == "__main__":
    key = jax.random.PRNGKey(0)
    k_x, k_p = jax.random.split(key)

    in_channels, out_channels = 4, 8
    N, H, W = 2, 16, 16

    # NHWC (channels-last) activations: the layout the kernel consumes directly.
    x = jax.random.normal(k_x, (N, H, W, in_channels), dtype=jnp.float32)
    (w1, s1, b1), (w2, s2, b2) = init_decoder_params(k_p, in_channels, out_channels)
    kparams = prepare_kernel_params(w1, s1, b1, w2, s2, b2, W)

    out = decoder_forward(x, *kparams)
    out = jax.block_until_ready(out)
    assert out.shape == (N, H, W, out_channels), out.shape
    assert out.dtype == jnp.bfloat16, out.dtype
    out_f32 = out.astype(jnp.float32)

    # Kernel uses bf16 MXU operands + bf16 output; compare against a matching
    # bf16-operand reference (tight) and the f32 "PyTorch-faithful" reference
    # (loose) to document the deviation.
    ref_bf = _reference_forward(x, w1, s1, b1, w2, s2, b2, mxu_dtype=jnp.bfloat16)
    ref_f32 = _reference_forward(x, w1, s1, b1, w2, s2, b2, mxu_dtype=jnp.float32)
    err_bf = float(jnp.max(jnp.abs(out_f32 - ref_bf)))
    err_f32 = float(jnp.max(jnp.abs(out_f32 - ref_f32)))
    assert jnp.allclose(out_f32, ref_bf, atol=2e-2, rtol=2e-2), err_bf
    assert jnp.allclose(out_f32, ref_f32, atol=1e-1, rtol=1e-1), err_f32

    # PyTorch NCHW-layout adapter parity (same kernel, layout adapters only).
    x_nchw = jnp.transpose(x, (0, 3, 1, 2))
    out_nchw = decoder_forward_nchw(x_nchw, *kparams)
    assert out_nchw.shape == (N, out_channels, H, W), out_nchw.shape
    assert jnp.allclose(jnp.transpose(out_nchw, (0, 2, 3, 1)).astype(jnp.float32),
                        out_f32, atol=1e-6)

    print("KERNEL_OK")
</pallas_src>

<mosaic_0001>
module attributes {stable_mosaic.version = 11 : i64} {
  func.func @_decoder_kernel(%arg0: i32, %arg1: memref<1x16x64xf32, #tpu.memory_space<vmem>>, %arg2: memref<192x128xbf16, #tpu.memory_space<vmem>>, %arg3: memref<1x128xf32, #tpu.memory_space<vmem>>, %arg4: memref<1x128xf32, #tpu.memory_space<vmem>>, %arg5: memref<384x128xbf16, #tpu.memory_space<vmem>>, %arg6: memref<1x128xf32, #tpu.memory_space<vmem>>, %arg7: memref<1x128xf32, #tpu.memory_space<vmem>>, %arg8: memref<1x16x128xbf16, #tpu.memory_space<vmem>>, %arg9: memref<16x192xbf16, #tpu.memory_space<vmem>>, %arg10: memref<16x384xbf16, #tpu.memory_space<vmem>>) attributes {dimension_semantics = [#tpu.dimension_semantics<parallel>], iteration_bounds = array<i64: 2>, scalar_prefetch = 0 : i64, scratch_operands = 2 : i64, tpu.core_type = #tpu.core_type<tc>, window_params = [{transform_indices = @transform_0, window_bounds = array<i64: 1, 16, 64>}, {pipeline_mode = #tpu.pipeline_mode<synchronous>, transform_indices = @transform_1, window_bounds = array<i64: 192, 128>}, {pipeline_mode = #tpu.pipeline_mode<synchronous>, transform_indices = @transform_2, window_bounds = array<i64: 1, 128>}, {pipeline_mode = #tpu.pipeline_mode<synchronous>, transform_indices = @transform_3, window_bounds = array<i64: 1, 128>}, {pipeline_mode = #tpu.pipeline_mode<synchronous>, transform_indices = @transform_4, window_bounds = array<i64: 384, 128>}, {pipeline_mode = #tpu.pipeline_mode<synchronous>, transform_indices = @transform_5, window_bounds = array<i64: 1, 128>}, {pipeline_mode = #tpu.pipeline_mode<synchronous>, transform_indices = @transform_6, window_bounds = array<i64: 1, 128>}, {transform_indices = @transform_7, window_bounds = array<i64: 1, 16, 128>}]} {
    %cst = arith.constant 0.000000e+00 : bf16
    %0 = vector.broadcast %cst : bf16 to vector<1x64xbf16>
    %cst_0 = arith.constant 0.000000e+00 : bf16
    %1 = vector.broadcast %cst_0 : bf16 to vector<1x128xbf16>
    %c0 = arith.constant 0 : index
    %c0_1 = arith.constant 0 : index
    %c0_2 = arith.constant 0 : index
    %2 = vector.load %arg1[%c0, %c0_1, %c0_2] : memref<1x16x64xf32, #tpu.memory_space<vmem>>, vector<1x16x64xf32>
    %3 = vector.shape_cast %2 : vector<1x16x64xf32> to vector<16x64xf32>
    %4 = arith.truncf %3 : vector<16x64xf32> to vector<16x64xbf16>
    %c0_3 = arith.constant 0 : index
    %c64 = arith.constant 64 : index
    %5 = vector.load %arg9[%c0_3, %c64] : memref<16x192xbf16, #tpu.memory_space<vmem>>, vector<16x64xbf16>
    tpu.vector_store %arg9[%c0_3, %c64], %4 {strides = array<i32>} : memref<16x192xbf16, #tpu.memory_space<vmem>>, vector<16x64xbf16>,
    %6 = vector.extract_strided_slice %4 {offsets = [0, 0], sizes = [15, 64], strides = [1, 1]} : vector<16x64xbf16> to vector<15x64xbf16>
    %c1 = arith.constant 1 : index
    %c0_4 = arith.constant 0 : index
    %7 = vector.load %arg9[%c1, %c0_4] : memref<16x192xbf16, #tpu.memory_space<vmem>>, vector<15x64xbf16>
    tpu.vector_store %arg9[%c1, %c0_4], %6 {strides = array<i32>} : memref<16x192xbf16, #tpu.memory_space<vmem>>, vector<15x64xbf16>,
    %c0_5 = arith.constant 0 : index
    %c0_6 = arith.constant 0 : index
    %8 = vector.load %arg9[%c0_5, %c0_6] : memref<16x192xbf16, #tpu.memory_space<vmem>>, vector<1x64xbf16>
    tpu.vector_store %arg9[%c0_5, %c0_6], %0 {strides = array<i32>} : memref<16x192xbf16, #tpu.memory_space<vmem>>, vector<1x64xbf16>,
    %9 = vector.extract_strided_slice %4 {offsets = [1, 0], sizes = [15, 64], strides = [1, 1]} : vector<16x64xbf16> to vector<15x64xbf16>
    %c0_7 = arith.constant 0 : index
    %c128 = arith.constant 128 : index
    %10 = vector.load %arg9[%c0_7, %c128] : memref<16x192xbf16, #tpu.memory_space<vmem>>, vector<15x64xbf16>
    tpu.vector_store %arg9[%c0_7, %c128], %9 {strides = array<i32>} : memref<16x192xbf16, #tpu.memory_space<vmem>>, vector<15x64xbf16>,
    %c15 = arith.constant 15 : index
    %c128_8 = arith.constant 128 : index
    %11 = vector.load %arg9[%c15, %c128_8] : memref<16x192xbf16, #tpu.memory_space<vmem>>, vector<1x64xbf16>
    tpu.vector_store %arg9[%c15, %c128_8], %0 {strides = array<i32>} : memref<16x192xbf16, #tpu.memory_space<vmem>>, vector<1x64xbf16>,
    %c0_9 = arith.constant 0 : index
    %c0_10 = arith.constant 0 : index
    %12 = vector.load %arg9[%c0_9, %c0_10] : memref<16x192xbf16, #tpu.memory_space<vmem>>, vector<16x192xbf16>
    %c0_11 = arith.constant 0 : index
    %c0_12 = arith.constant 0 : index
    %13 = vector.load %arg2[%c0_11, %c0_12] : memref<192x128xbf16, #tpu.memory_space<vmem>>, vector<192x128xbf16>
    %cst_13 = arith.constant dense<0.000000e+00> : vector<16x128xf32>
    %14 = tpu.matmul %12, %13, %cst_13 {dimension_numbers = #tpu.dot_dimension_numbers<[1], [0], [0], [1], [0, 0, 1, 1], [], []>} : vector<16x192xbf16>, vector<192x128xbf16>, vector<16x128xf32> -> vector<16x128xf32>
    %c0_14 = arith.constant 0 : index
    %c0_15 = arith.constant 0 : index
    %15 = vector.load %arg3[%c0_14, %c0_15] : memref<1x128xf32, #tpu.memory_space<vmem>>, vector<1x128xf32>
    %16 = vector.broadcast %15 : vector<1x128xf32> to vector<16x128xf32>
    %17 = arith.mulf %14, %16 : vector<16x128xf32>
    %c0_16 = arith.constant 0 : index
    %c0_17 = arith.constant 0 : index
    %18 = vector.load %arg4[%c0_16, %c0_17] : memref<1x128xf32, #tpu.memory_space<vmem>>, vector<1x128xf32>
    %19 = vector.broadcast %18 : vector<1x128xf32> to vector<16x128xf32>
    %20 = arith.addf %17, %19 : vector<16x128xf32>
    %cst_18 = arith.constant 0.000000e+00 : f32
    %21 = vector.broadcast %cst_18 : f32 to vector<16x128xf32>
    %22 = arith.maximumf %20, %21 : vector<16x128xf32>
    %23 = arith.truncf %22 : vector<16x128xf32> to vector<16x128xbf16>
    %c0_19 = arith.constant 0 : index
    %c128_20 = arith.constant 128 : index
    %24 = vector.load %arg10[%c0_19, %c128_20] : memref<16x384xbf16, #tpu.memory_space<vmem>>, vector<16x128xbf16>
    tpu.vector_store %arg10[%c0_19, %c128_20], %23 {strides = array<i32>} : memref<16x384xbf16, #tpu.memory_space<vmem>>, vector<16x128xbf16>,
    %25 = vector.extract_strided_slice %23 {offsets = [0, 0], sizes = [15, 128], strides = [1, 1]} : vector<16x128xbf16> to vector<15x128xbf16>
    %c1_21 = arith.constant 1 : index
    %c0_22 = arith.constant 0 : index
    %26 = vector.load %arg10[%c1_21, %c0_22] : memref<16x384xbf16, #tpu.memory_space<vmem>>, vector<15x128xbf16>
    tpu.vector_store %arg10[%c1_21, %c0_22], %25 {strides = array<i32>} : memref<16x384xbf16, #tpu.memory_space<vmem>>, vector<15x128xbf16>,
    %c0_23 = arith.constant 0 : index
    %c0_24 = arith.constant 0 : index
    %27 = vector.load %arg10[%c0_23, %c0_24] : memref<16x384xbf16, #tpu.memory_space<vmem>>, vector<1x128xbf16>
    tpu.vector_store %arg10[%c0_23, %c0_24], %1 {strides = array<i32>} : memref<16x384xbf16, #tpu.memory_space<vmem>>, vector<1x128xbf16>,
    %28 = vector.extract_strided_slice %23 {offsets = [1, 0], sizes = [15, 128], strides = [1, 1]} : vector<16x128xbf16> to vector<15x128xbf16>
    %c0_25 = arith.constant 0 : index
    %c256 = arith.constant 256 : index
    %29 = vector.load %arg10[%c0_25, %c256] : memref<16x384xbf16, #tpu.memory_space<vmem>>, vector<15x128xbf16>
    tpu.vector_store %arg10[%c0_25, %c256], %28 {strides = array<i32>} : memref<16x384xbf16, #tpu.memory_space<vmem>>, vector<15x128xbf16>,
    %c15_26 = arith.constant 15 : index
    %c256_27 = arith.constant 256 : index
    %30 = vector.load %arg10[%c15_26, %c256_27] : memref<16x384xbf16, #tpu.memory_space<vmem>>, vector<1x128xbf16>
    tpu.vector_store %arg10[%c15_26, %c256_27], %1 {strides = array<i32>} : memref<16x384xbf16, #tpu.memory_space<vmem>>, vector<1x128xbf16>,
    %c0_28 = arith.constant 0 : index
    %c0_29 = arith.constant 0 : index
    %31 = vector.load %arg10[%c0_28, %c0_29] : memref<16x384xbf16, #tpu.memory_space<vmem>>, vector<16x384xbf16>
    %c0_30 = arith.constant 0 : index
    %c0_31 = arith.constant 0 : index
    %32 = vector.load %arg5[%c0_30, %c0_31] : memref<384x128xbf16, #tpu.memory_space<vmem>>, vector<384x128xbf16>
    %cst_32 = arith.constant dense<0.000000e+00> : vector<16x128xf32>
    %33 = tpu.matmul %31, %32, %cst_32 {dimension_numbers = #tpu.dot_dimension_numbers<[1], [0], [0], [1], [0, 0, 1, 1], [], []>} : vector<16x384xbf16>, vector<384x128xbf16>, vector<16x128xf32> -> vector<16x128xf32>
    %c0_33 = arith.constant 0 : index
    %c0_34 = arith.constant 0 : index
    %34 = vector.load %arg6[%c0_33, %c0_34] : memref<1x128xf32, #tpu.memory_space<vmem>>, vector<1x128xf32>
    %35 = vector.broadcast %34 : vector<1x128xf32> to vector<16x128xf32>
    %36 = arith.mulf %33, %35 : vector<16x128xf32>
    %c0_35 = arith.constant 0 : index
    %c0_36 = arith.constant 0 : index
    %37 = vector.load %arg7[%c0_35, %c0_36] : memref<1x128xf32, #tpu.memory_space<vmem>>, vector<1x128xf32>
    %38 = vector.broadcast %37 : vector<1x128xf32> to vector<16x128xf32>
    %39 = arith.addf %36, %38 : vector<16x128xf32>
    %cst_37 = arith.constant 0.000000e+00 : f32
    %40 = vector.broadcast %cst_37 : f32 to vector<16x128xf32>
    %41 = arith.maximumf %39, %40 : vector<16x128xf32>
    %42 = arith.truncf %41 : vector<16x128xf32> to vector<16x128xbf16>
    %c0_38 = arith.constant 0 : index
    %c0_39 = arith.constant 0 : index
    %c0_40 = arith.constant 0 : index
    %43 = vector.load %arg8[%c0_38, %c0_39, %c0_40] : memref<1x16x128xbf16, #tpu.memory_space<vmem>>, vector<1x16x128xbf16>
    %44 = vector.shape_cast %43 : vector<1x16x128xbf16> to vector<16x128xbf16>
    %45 = vector.shape_cast %42 : vector<16x128xbf16> to vector<1x16x128xbf16>
    tpu.vector_store %arg8[%c0_38, %c0_39, %c0_40], %45 {strides = array<i32>} : memref<1x16x128xbf16, #tpu.memory_space<vmem>>, vector<1x16x128xbf16>,
    return
  }
  func.func @transform_0(%arg0: i32) -> (i32, i32, i32) {
    %c0_i32 = arith.constant 0 : i32
    %c0_i32_0 = arith.constant 0 : i32
    %c0_i32_1 = arith.constant 0 : i32
    return %arg0, %c0_i32, %c0_i32_0 : i32, i32, i32
  }
  func.func @transform_1(%arg0: i32) -> (i32, i32) {
    %c0_i32 = arith.constant 0 : i32
    %c0_i32_0 = arith.constant 0 : i32
    %c0_i32_1 = arith.constant 0 : i32
    return %c0_i32, %c0_i32_0 : i32, i32
  }
  func.func @transform_2(%arg0: i32) -> (i32, i32) {
    %c0_i32 = arith.constant 0 : i32
    %c0_i32_0 = arith.constant 0 : i32
    %c0_i32_1 = arith.constant 0 : i32
    return %c0_i32, %c0_i32_0 : i32, i32
  }
  func.func @transform_3(%arg0: i32) -> (i32, i32) {
    %c0_i32 = arith.constant 0 : i32
    %c0_i32_0 = arith.constant 0 : i32
    %c0_i32_1 = arith.constant 0 : i32
    return %c0_i32, %c0_i32_0 : i32, i32
  }
  func.func @transform_4(%arg0: i32) -> (i32, i32) {
    %c0_i32 = arith.constant 0 : i32
    %c0_i32_0 = arith.constant 0 : i32
    %c0_i32_1 = arith.constant 0 : i32
    return %c0_i32, %c0_i32_0 : i32, i32
  }
  func.func @transform_5(%arg0: i32) -> (i32, i32) {
    %c0_i32 = arith.constant 0 : i32
    %c0_i32_0 = arith.constant 0 : i32
    %c0_i32_1 = arith.constant 0 : i32
    return %c0_i32, %c0_i32_0 : i32, i32
  }
  func.func @transform_6(%arg0: i32) -> (i32, i32) {
    %c0_i32 = arith.constant 0 : i32
    %c0_i32_0 = arith.constant 0 : i32
    %c0_i32_1 = arith.constant 0 : i32
    return %c0_i32, %c0_i32_0 : i32, i32
  }
  func.func @transform_7(%arg0: i32) -> (i32, i32, i32) {
    %c0_i32 = arith.constant 0 : i32
    %c0_i32_0 = arith.constant 0 : i32
    %c0_i32_1 = arith.constant 0 : i32
    return %arg0, %c0_i32, %c0_i32_0 : i32, i32, i32
  }
}

</mosaic_0001>

<llo_original>
// kernel: decoder_forward.1
$region0: #{decoder_forward.1}
  #allocation0 [shape = 'u32[]', space=smem, size = 0x4, offset = 0x4, fixed_abs, tag = 'smem constant byte address 0x4 - core index']
  #allocation1 [shape = 'u32[144,128]{1,0:T(1,128)}', space=vmem, size = 0x12000, scoped, tag = 'internal scratch']
  #allocation2 [shape = 'bf16[16,192]{1,0:T(16,128)(2,1)}', space=vmem, size = 0x2000, scoped, tag = 'scratch operand']
  #allocation3 [shape = 'bf16[16,384]{1,0:T(16,128)(2,1)}', space=vmem, size = 0x3000, scoped, tag = 'scratch operand']
  %s0 = inlined_call_operand.vmem [shape: f32[2,16,64], index: 0, kind: input, shape index: {}]
  %s1 = inlined_call_operand.vmem [shape: bf16[192,128], index: 1, kind: input, shape index: {}]
  %s2 = inlined_call_operand.vmem [shape: f32[1,128], index: 2, kind: input, shape index: {}]
  %s3 = inlined_call_operand.vmem [shape: f32[1,128], index: 3, kind: input, shape index: {}]
  %s4 = inlined_call_operand.vmem [shape: bf16[384,128], index: 4, kind: input, shape index: {}]
  %s5 = inlined_call_operand.vmem [shape: f32[1,128], index: 5, kind: input, shape index: {}]
  %s6 = inlined_call_operand.vmem [shape: f32[1,128], index: 6, kind: input, shape index: {}]
  %s7 = inlined_call_operand.vmem [shape: bf16[2,16,128], index: 7, kind: output, shape index: {}]
  %s8 = sld [smem:[#allocation0]]
  $region61: #{decoder_forward.1} parent=0
    _
  %s10 = ssub.s32 1, %s8
  %s11 = scalar_select 0, %s10, %s8
  loop: start=0, step=1, limit=4
  $region2: #{decoder_forward.1} parent=0 // loop_pre_header
    _
  $region3: #{decoder_forward.1} parent=0 // loop_header
    %s13 = sphi 0, %s17
    %p14 = scmp.ge.s32.totalorder %s13, 4
    %s23 = sphi 0, %s25
    %s26 = sphi 0, %s23
    %s27 = sphi 0, %s26
    %s43 = sphi 0, %s27
    %s47 = sphi 0, %s47
    %s49 = sphi 0, %s47
    %s50 = sphi 0, %s49
    %s64 = sphi 0, %s50
    %s68 = sphi 0, %s68
    %s70 = sphi 0, %s68
    %s71 = sphi 0, %s70
    %s85 = sphi 0, %s71
    %s89 = sphi 0, %s89
    %s91 = sphi 0, %s89
    %s92 = sphi 0, %s91
    %s106 = sphi 0, %s92
    %s110 = sphi 0, %s110
    %s112 = sphi 0, %s110
    %s113 = sphi 0, %s112
    %s127 = sphi 0, %s113
    %s131 = sphi 0, %s131
    %s133 = sphi 0, %s131
    %s134 = sphi 0, %s133
    %s148 = sphi 0, %s134
    %s152 = sphi 0, %s152
    %s154 = sphi 0, %s152
    %s155 = sphi 0, %s154
    %s169 = sphi 0, %s155
    %s175 = sphi 0, %s177
    %s178 = sphi 0, %s175
    %s179 = sphi 0, %s178
    %s195 = sphi 0, %s179
  $region4: #{decoder_forward.1} parent=0 // loop_header_branch
    %16 = sbr.rel (%p14) target = $region8
  $region5: #{decoder_forward.1} parent=0 // loop_body
    %s18 = ssub.s32 %s13, 1
    %s19 = ssub.s32 %s13, 2
    %s20 = sadd.s32 %s13, 1
    %s21 = ssub.s32 %s13, %s20
    %p22 = scmp.eq.s32.totalorder %s21, 0
    %s24 = sadd.s32 %s23, 1
    %s25 = scalar_select %p22, %s23, %s24
    %p28 = pneg %p22
    %p29 = scmp.eq.s32.totalorder %s13, 1
    %p30 = por %p28, %p29
    %p31 = scmp.ne.s32.totalorder %s23, %s26
    %p32 = scmp.eq.s32.totalorder %s13, 0
    %p33 = por %p31, %p32
    %p34 = scmp.ne.s32.totalorder %s23, %s26
    %p35 = scmp.eq.s32.totalorder %s18, 1
    %p36 = por %p34, %p35
    %p37 = scmp.ne.s32.totalorder %s26, %s27
    %p38 = scmp.eq.s32.totalorder %s18, 0
    %p39 = por %p37, %p38
    %p40 = scmp.ne.s32.totalorder %s26, %s27
    %p41 = scmp.eq.s32.totalorder %s19, 1
    %p42 = por %p40, %p41
    %p44 = scmp.ne.s32.totalorder %s27, %s43
    %p45 = scmp.eq.s32.totalorder %s19, 0
    %p46 = por %p44, %p45
    %s48 = sadd.s32 %s47, 1
    %p51 = scmp.eq.s32.totalorder %s13, 1
    %p52 = scmp.ne.s32.totalorder %s47, %s49
    %p53 = scmp.eq.s32.totalorder %s13, 0
    %p54 = por %p52, %p53
    %p55 = scmp.ne.s32.totalorder %s47, %s49
    %p56 = scmp.eq.s32.totalorder %s18, 1
    %p57 = por %p55, %p56
    %p58 = scmp.ne.s32.totalorder %s49, %s50
    %p59 = scmp.eq.s32.totalorder %s18, 0
    %p60 = por %p58, %p59
    %p61 = scmp.ne.s32.totalorder %s49, %s50
    %p62 = scmp.eq.s32.totalorder %s19, 1
    %p63 = por %p61, %p62
    %p65 = scmp.ne.s32.totalorder %s50, %s64
    %p66 = scmp.eq.s32.totalorder %s19, 0
    %p67 = por %p65, %p66
    %s69 = sadd.s32 %s68, 1
    %p72 = scmp.eq.s32.totalorder %s13, 1
    %p73 = scmp.ne.s32.totalorder %s68, %s70
    %p74 = scmp.eq.s32.totalorder %s13, 0
    %p75 = por %p73, %p74
    %p76 = scmp.ne.s32.totalorder %s68, %s70
    %p77 = scmp.eq.s32.totalorder %s18, 1
    %p78 = por %p76, %p77
    %p79 = scmp.ne.s32.totalorder %s70, %s71
    %p80 = scmp.eq.s32.totalorder %s18, 0
    %p81 = por %p79, %p80
    %p82 = scmp.ne.s32.totalorder %s70, %s71
    %p83 = scmp.eq.s32.totalorder %s19, 1
    %p84 = por %p82, %p83
    %p86 = scmp.ne.s32.totalorder %s71, %s85
    %p87 = scmp.eq.s32.totalorder %s19, 0
    %p88 = por %p86, %p87
    %s90 = sadd.s32 %s89, 1
    %p93 = scmp.eq.s32.totalorder %s13, 1
    %p94 = scmp.ne.s32.totalorder %s89, %s91
    %p95 = scmp.eq.s32.totalorder %s13, 0
    %p96 = por %p94, %p95
    %p97 = scmp.ne.s32.totalorder %s89, %s91
    %p98 = scmp.eq.s32.totalorder %s18, 1
    %p99 = por %p97, %p98
    %p100 = scmp.ne.s32.totalorder %s91, %s92
    %p101 = scmp.eq.s32.totalorder %s18, 0
    %p102 = por %p100, %p101
    %p103 = scmp.ne.s32.totalorder %s91, %s92
    %p104 = scmp.eq.s32.totalorder %s19, 1
    %p105 = por %p103, %p104
    %p107 = scmp.ne.s32.totalorder %s92, %s106
    %p108 = scmp.eq.s32.totalorder %s19, 0
    %p109 = por %p107, %p108
    %s111 = sadd.s32 %s110, 1
    %p114 = scmp.eq.s32.totalorder %s13, 1
    %p115 = scmp.ne.s32.totalorder %s110, %s112
    %p116 = scmp.eq.s32.totalorder %s13, 0
    %p117 = por %p115, %p116
    %p118 = scmp.ne.s32.totalorder %s110, %s112
    %p119 = scmp.eq.s32.totalorder %s18, 1
    %p120 = por %p118, %p119
    %p121 = scmp.ne.s32.totalorder %s112, %s113
    %p122 = scmp.eq.s32.totalorder %s18, 0
    %p123 = por %p121, %p122
    %p124 = scmp.ne.s32.totalorder %s112, %s113
    %p125 = scmp.eq.s32.totalorder %s19, 1
    %p126 = por %p124, %p125
    %p128 = scmp.ne.s32.totalorder %s113, %s127
    %p129 = scmp.eq.s32.totalorder %s19, 0
    %p130 = por %p128, %p129
    %s132 = sadd.s32 %s131, 1
    %p135 = scmp.eq.s32.totalorder %s13, 1
    %p136 = scmp.ne.s32.totalorder %s131, %s133
    %p137 = scmp.eq.s32.totalorder %s13, 0
    %p138 = por %p136, %p137
    %p139 = scmp.ne.s32.totalorder %s131, %s133
    %p140 = scmp.eq.s32.totalorder %s18, 1
    %p141 = por %p139, %p140
    %p142 = scmp.ne.s32.totalorder %s133, %s134
    %p143 = scmp.eq.s32.totalorder %s18, 0
    %p144 = por %p142, %p143
    %p145 = scmp.ne.s32.totalorder %s133, %s134
    %p146 = scmp.eq.s32.totalorder %s19, 1
    %p147 = por %p145, %p146
    %p149 = scmp.ne.s32.totalorder %s134, %s148
    %p150 = scmp.eq.s32.totalorder %s19, 0
    %p151 = por %p149, %p150
    %s153 = sadd.s32 %s152, 1
    %p156 = scmp.eq.s32.totalorder %s13, 1
    %p157 = scmp.ne.s32.totalorder %s152, %s154
    %p158 = scmp.eq.s32.totalorder %s13, 0
    %p159 = por %p157, %p158
    %p160 = scmp.ne.s32.totalorder %s152, %s154
    %p161 = scmp.eq.s32.totalorder %s18, 1
    %p162 = por %p160, %p161
    %p163 = scmp.ne.s32.totalorder %s154, %s155
    %p164 = scmp.eq.s32.totalorder %s18, 0
    %p165 = por %p163, %p164
    %p166 = scmp.ne.s32.totalorder %s154, %s155
    %p167 = scmp.eq.s32.totalorder %s19, 1
    %p168 = por %p166, %p167
    %p170 = scmp.ne.s32.totalorder %s155, %s169
    %p171 = scmp.eq.s32.totalorder %s19, 0
    %p172 = por %p170, %p171
    %s173 = ssub.s32 %s13, %s20
    %p174 = scmp.eq.s32.totalorder %s173, 0
    %s176 = sadd.s32 %s175, 1
    %s177 = scalar_select %p174, %s175, %s176
    %p180 = pneg %p174
    %p181 = scmp.eq.s32.totalorder %s13, 1
    %p182 = por %p180, %p181
    %p183 = scmp.ne.s32.totalorder %s175, %s178
    %p184 = scmp.eq.s32.totalorder %s13, 0
    %p185 = por %p183, %p184
    %p186 = scmp.ne.s32.totalorder %s175, %s178
    %p187 = scmp.eq.s32.totalorder %s18, 1
    %p188 = por %p186, %p187
    %p189 = scmp.ne.s32.totalorder %s178, %s179
    %p190 = scmp.eq.s32.totalorder %s18, 0
    %p191 = por %p189, %p190
    %p192 = scmp.ne.s32.totalorder %s178, %s179
    %p193 = scmp.eq.s32.totalorder %s19, 1
    %p194 = por %p192, %p193
    %p196 = scmp.ne.s32.totalorder %s179, %s195
    %p197 = scmp.eq.s32.totalorder %s19, 0
    %p198 = por %p196, %p197
    %p199 = scmp.le.s32.totalorder 1, %s13
    %p200 = scmp.lt.s32.totalorder %s13, 3
    %p201 = pnand %p199, %p200
    %p202 = pneg %p201
    // Predicated region
    $region9: #{decoder_forward.1} parent=5 // pred_check
      _
    $region10: #{decoder_forward.1} parent=5 // pred_check_branch
      %204 = sbr.rel (%p201) target = $region12
    $region11: #{decoder_forward.1} parent=5 // pred_region
      %s205 = ssub.s32 %s13, 1
      // Predicated region
      $region13: #{decoder_forward.1} parent=11 // pred_check
        %p206 = pneg %p60
      $region14: #{decoder_forward.1} parent=11 // pred_check_branch
        %208 = sbr.rel (%p206) target = $region16
      $region15: #{decoder_forward.1} parent=11 // pred_region
        _
      $region16: #{decoder_forward.1} parent=11 // pred_fallthru
        _
      // Predicated region
      $region17: #{decoder_forward.1} parent=11 // pred_check
        %p209 = pneg %p81
      $region18: #{decoder_forward.1} parent=11 // pred_check_branch
        %211 = sbr.rel (%p209) target = $region20
      $region19: #{decoder_forward.1} parent=11 // pred_region
        _
      $region20: #{decoder_forward.1} parent=11 // pred_fallthru
        _
      // Predicated region
      $region21: #{decoder_forward.1} parent=11 // pred_check
        %p212 = pneg %p102
      $region22: #{decoder_forward.1} parent=11 // pred_check_branch
        %214 = sbr.rel (%p212) target = $region24
      $region23: #{decoder_forward.1} parent=11 // pred_region
        _
      $region24: #{decoder_forward.1} parent=11 // pred_fallthru
        _
      // Predicated region
      $region25: #{decoder_forward.1} parent=11 // pred_check
        %p215 = pneg %p123
      $region26: #{decoder_forward.1} parent=11 // pred_check_branch
        %217 = sbr.rel (%p215) target = $region28
      $region27: #{decoder_forward.1} parent=11 // pred_region
        _
      $region28: #{decoder_forward.1} parent=11 // pred_fallthru
        _
      // Predicated region
      $region29: #{decoder_forward.1} parent=11 // pred_check
        %p218 = pneg %p144
      $region30: #{decoder_forward.1} parent=11 // pred_check_branch
        %220 = sbr.rel (%p218) target = $region32
      $region31: #{decoder_forward.1} parent=11 // pred_region
        _
      $region32: #{decoder_forward.1} parent=11 // pred_fallthru
        _
      // Predicated region
      $region33: #{decoder_forward.1} parent=11 // pred_check
        %p221 = pneg %p165
      $region34: #{decoder_forward.1} parent=11 // pred_check_branch
        %223 = sbr.rel (%p221) target = $region36
      $region35: #{decoder_forward.1} parent=11 // pred_region
        _
      $region36: #{decoder_forward.1} parent=11 // pred_fallthru
        _
    $region12: #{decoder_forward.1} parent=5 // pred_fallthru
      _
    %p224 = scmp.lt.s32.totalorder %s13, 2
    // Predicated region
    $region37: #{decoder_forward.1} parent=5 // pred_check
      %p225 = pneg %p224
    $region38: #{decoder_forward.1} parent=5 // pred_check_branch
      %227 = sbr.rel (%p225) target = $region40
    $region39: #{decoder_forward.1} parent=5 // pred_region
      // Predicated region
      $region41: #{decoder_forward.1} parent=39 // pred_check
        %p228 = pneg %p33
      $region42: #{decoder_forward.1} parent=39 // pred_check_branch
        %230 = sbr.rel (%p228) target = $region44
      $region43: #{decoder_forward.1} parent=39 // pred_region
        %p231 = scmp.lt.s32.totalorder %s13, 1
        %s232 = scalar_select %p231, %s13, 1
        %s233 = smul.addr %s232, 2
        %s234 = smul.addr %s233, 8
        %s235 = scalar_lea.vmem %s0, %s234
      $region44: #{decoder_forward.1} parent=39 // pred_fallthru
        _
    $region40: #{decoder_forward.1} parent=5 // pred_fallthru
      _
    %p236 = scmp.le.s32.totalorder 1, %s13
    %p237 = scmp.lt.s32.totalorder %s13, 3
    %p238 = pnand %p236, %p237
    %p239 = pneg %p238
    // Predicated region
    $region45: #{decoder_forward.1} parent=5 // pred_check
      _
    $region46: #{decoder_forward.1} parent=5 // pred_check_branch
      %241 = sbr.rel (%p238) target = $region48
    $region47: #{decoder_forward.1} parent=5 // pred_region
      %s242 = ssub.s32 %s13, 1
      %p243 = scmp.lt.s32.totalorder %s18, 1
      %s244 = scalar_select %p243, %s18, 1
      %s245 = smul.addr %s244, 2
      %s246 = smul.addr %s245, 8
      %s247 = scalar_lea.vmem %s0, %s246
      %p248 = pneg %p39
      %p249 = pneg %p36
      %p250 = pneg %p60
      %p251 = pneg %p57
      %p252 = pneg %p81
      %p253 = pneg %p78
      %p254 = pneg %p102
      %p255 = pneg %p99
      %p256 = pneg %p123
      %p257 = pneg %p120
      %p258 = pneg %p144
      %p259 = pneg %p141
      %p260 = pneg %p165
      %p261 = pneg %p162
      %p262 = pneg %p191
      %p263 = pneg %p188
      %p264 = scmp.lt.s32.totalorder %s18, 1
      %s265 = scalar_select %p264, %s18, 1
      %s266 = smul.addr %s265, 2
      %s267 = smul.addr %s266, 4
      %s268 = scalar_lea.vmem %s7, %s267
      %p269 = scmp.lt.s32.totalorder %s18, 1
      %s270 = scalar_select %p269, %s18, 1
      %s271 = smul.addr %s270, 2
      %s272 = smul.addr %s271, 8
      %s273 = scalar_lea.vmem %s0, %s272
      %p274 = scmp.lt.s32.totalorder %s18, 1
      %s275 = scalar_select %p274, %s18, 1
      %s276 = smul.addr %s275, 2
      %s277 = smul.addr %s276, 4
      %s278 = scalar_lea.vmem %s7, %s277
      %v280 = vld [vmem:[%s273] sm:$0xff]
      %v281 = vld [vmem:[%s273 + $0x8] sm:$0xff]
      %v282 = vpack.c.bf16 %v281, %v280
      %284 = vrot.lane.b32.xlu0 %v282, 64
      %v285 = vpop.permute.xlu0 %284
      %vm287 = vcmask 1048064
      %288 = vst.msk [vmem:[#allocation2] sm:$0xff] %vm287, %v285
      %v290 = vshrl.u32 %v282, 16
      %v292 = vrot.slane %v290, 7
      %v293 = vshll.u32 %v282, 16
      %v295 = vor.u32 %v292, %v293
      %vm297 = vcmask 523264
      %vm298 = vsmask.f32 7938
      %vm299 = vmand %vm297, %vm298
      %v300 = vld [vmem:[#allocation2] sm:$0xff]
      %v301 = vsel %vm299, %v295, %v300
      %302 = vst [vmem:[#allocation2] sm:$0xff] %v301
      %vm303 = vcmask 516096
      %vm304 = vsmask.f32 256
      %vm305 = vmand %vm303, %vm304
      %v306 = vld [vmem:[#allocation2] sm:$0x1]
      %v307 = vsel %vm305, 0, %v306
      %308 = vst [vmem:[#allocation2] sm:$0x1] %v307
      %v309 = vrot.slane %v293, 1
      %v310 = vor.u32 %v290, %v309
      %vm312 = vsmask.f32 7424
      %vm313 = vmand %vm297, %vm312
      %v314 = vld [vmem:[#allocation2 + $0x8] sm:$0xff]
      %v315 = vsel %vm313, %v310, %v314
      %316 = vst [vmem:[#allocation2 + $0x8] sm:$0xff] %v315
      %vm317 = vcmask 523271
      %vm318 = vsmask.f32 7966
      %vm319 = vmand %vm317, %vm318
      %v320 = vld [vmem:[#allocation2 + $0x8] sm:$0x80]
      %v321 = vsel %vm319, 0, %v320
      %322 = vst [vmem:[#allocation2 + $0x8] sm:$0x80] %v321
      %v323 = vld [vmem:[#allocation2] sm:$0xff]
      %v324 = vld [vmem:[#allocation2 + $0x8] sm:$0xff]
      %v325 = vld [vmem:[%s1] sm:$0xf]
      %v326 = vld [vmem:[%s1 + $0x4] sm:$0xf]
      %v327 = vld [vmem:[%s1 + $0x8] sm:$0xf]
      %v328 = vld [vmem:[%s1 + $0xc] sm:$0xf]
      %v329 = vld [vmem:[%s1 + $0x10] sm:$0xf]
      %v330 = vld [vmem:[%s1 + $0x14] sm:$0xf]
      %v331 = vld [vmem:[%s1 + $0x18] sm:$0xf]
      %v332 = vld [vmem:[%s1 + $0x1c] sm:$0xf]
      %v333 = vld [vmem:[%s1 + $0x20] sm:$0xf]
      %v334 = vld [vmem:[%s1 + $0x24] sm:$0xf]
      %v335 = vld [vmem:[%s1 + $0x28] sm:$0xf]
      %v336 = vld [vmem:[%s1 + $0x2c] sm:$0xf]
      %v337 = vld [vmem:[%s1 + $0x30] sm:$0xf]
      %v338 = vld [vmem:[%s1 + $0x34] sm:$0xf]
      %v339 = vld [vmem:[%s1 + $0x38] sm:$0xf]
      %v340 = vld [vmem:[%s1 + $0x3c] sm:$0xf]
      %v341 = vld [vmem:[%s1 + $0x40] sm:$0xf]
      %v342 = vld [vmem:[%s1 + $0x44] sm:$0xf]
      %v343 = vld [vmem:[%s1 + $0x48] sm:$0xf]
      %v344 = vld [vmem:[%s1 + $0x4c] sm:$0xf]
      %v345 = vld [vmem:[%s1 + $0x50] sm:$0xf]
      %v346 = vld [vmem:[%s1 + $0x54] sm:$0xf]
      %v347 = vld [vmem:[%s1 + $0x58] sm:$0xf]
      %v348 = vld [vmem:[%s1 + $0x5c] sm:$0xf]
      %v373 = vunpack.c.l.b16 %v325
      %v374 = vunpack.c.l.b16 %v326
      %v375 = vunpack.c.l.b16 %v327
      %v376 = vunpack.c.l.b16 %v328
      %v377 = vunpack.c.l.b16 %v329
      %v378 = vunpack.c.l.b16 %v330
      %v379 = vunpack.c.l.b16 %v331
      %v380 = vunpack.c.l.b16 %v332
      %v381 = vunpack.c.l.b16 %v333
      %v382 = vunpack.c.l.b16 %v334
      %v383 = vunpack.c.l.b16 %v335
      %v384 = vunpack.c.l.b16 %v336
      %v385 = vunpack.c.l.b16 %v337
      %v386 = vunpack.c.l.b16 %v338
      %v387 = vunpack.c.l.b16 %v339
      %v388 = vunpack.c.l.b16 %v340
      %v389 = vunpack.c.l.b16 %v341
      %v390 = vunpack.c.l.b16 %v342
      %v391 = vunpack.c.l.b16 %v343
      %v392 = vunpack.c.l.b16 %v344
      %v393 = vunpack.c.l.b16 %v345
      %v394 = vunpack.c.l.b16 %v346
      %v395 = vunpack.c.l.b16 %v347
      %v396 = vunpack.c.l.b16 %v348
      %v397 = vpack.c.b16 %v374, %v373
      %v398 = vpack.c.b16 %v376, %v375
      %v399 = vpack.c.b16 %v378, %v377
      %v400 = vpack.c.b16 %v380, %v379
      %v401 = vpack.c.b16 %v382, %v381
      %v402 = vpack.c.b16 %v384, %v383
      %v403 = vpack.c.b16 %v386, %v385
      %v404 = vpack.c.b16 %v388, %v387
      %v405 = vpack.c.b16 %v390, %v389
      %v406 = vpack.c.b16 %v392, %v391
      %v407 = vpack.c.b16 %v394, %v393
      %v408 = vpack.c.b16 %v396, %v395
      %vm421 = vcmask 523264
      %v423 = vsel %vm421, %v324, 0
      %425 = vmatprep.subr.bf16.mxu0 0
      %426 = vmatpush1.bf16.msra.mxu0 %v397
      %427 = vmatprep.subr.bf16.mxu0 0
      %428 = vmatpush1.bf16.msra.mxu0 %v398
      %429 = vmatprep.subr.bf16.mxu0 0
      %430 = vmatpush1.bf16.msra.mxu0 %v399
      %431 = vmatprep.subr.bf16.mxu0 0
      %432 = vmatpush1.bf16.msra.mxu0 %v400
      %433 = vmatprep.subr.bf16.mxu0 0
      %434 = vmatpush1.bf16.msra.mxu0 %v401
      %435 = vmatprep.subr.bf16.mxu0 0
      %436 = vmatpush1.bf16.msra.mxu0 %v402
      %437 = vmatprep.subr.bf16.mxu0 0
      %438 = vmatpush1.bf16.msra.mxu0 %v403
      %439 = vmatprep.subr.bf16.mxu0 0
      %440 = vmatpush1.bf16.msra.mxu0 %v404
      %441 = vmatprep.subr.bf16.mxu0 0
      %442 = vmatpush1.bf16.msra.mxu0 %v405
      %443 = vmatprep.subr.bf16.mxu0 0
      %444 = vmatpush1.bf16.msra.mxu0 %v406
      %445 = vmatprep.subr.bf16.mxu0 0
      %446 = vmatpush1.bf16.msra.mxu0 %v407
      %447 = vmatprep.subr.bf16.mxu0 0
      %448 = vmatpush1.bf16.msra.mxu0 %v408
      %449 = vmatprep.subr.bf16.mxu0 0
      %450 = vmatpush1.bf16.msra.mxu0 0
      %451 = vmatprep.subr.bf16.mxu0 0
      %452 = vmatpush1.bf16.msra.mxu0 0
      %453 = vmatprep.subr.bf16.mxu0 0
      %454 = vmatpush1.bf16.msra.mxu0 0
      %455 = vmatprep.subr.bf16.mxu0 0
      %456 = vmatpush1.bf16.msra.mxu0 0
      %457 = vmatprep.mubr.bf16.mxu0 %v423
      %458 = vmatmul.mubr.bf16.gmra.mrb[0].mxu0 %v323
      %v459 = vpop.f32.mrb[0].mxu0
      %v460 = vadd.f32 0.0, %v459
      %v461 = vpop.f32.mrb[0].mxu0
      %v462 = vpop.f32.mrb[0].mxu0
      %v463 = vadd.f32 0.0, %v462
      %v464 = vpop.f32.mrb[0].mxu0
      %465 = vdwg.mxu0
      %v466 = vld [vmem:[%s2] sm:$0x1]
      %v468 = vlaneseq
      %v469 = vshrl.u32 %v468, 7
      %v470 = vsub.s32 0, %v469
      %v471 = vrot.slane %v466, %v470
      %v473 = vmul.f32 %v460, %v471
      %v474 = vmul.f32 %v463, %v471
      %v475 = vld [vmem:[%s3] sm:$0x1]
      %v477 = vlaneseq
      %v478 = vshrl.u32 %v477, 7
      %v479 = vsub.s32 0, %v478
      %v480 = vrot.slane %v475, %v479
      %v482 = vadd.f32 %v473, %v480
      %v483 = vadd.f32 %v474, %v480
      %v484 = vmax.f32 %v482, 0.0
      %v485 = vmax.f32 %v483, 0.0
      %v486 = vpack.c.bf16 %v485, %v484
      %487 = vst [vmem:[#allocation3 + $0x8] sm:$0xff] %v486
      %v489 = vshrl.u32 %v486, 16
      %v491 = vrot.slane %v489, 7
      %v492 = vshll.u32 %v486, 16
      %v494 = vor.u32 %v491, %v492
      %vm496 = vcmask 1047552
      %vm497 = vmand %vm496, %vm298
      %v498 = vld [vmem:[#allocation3] sm:$0xff]
      %v499 = vsel %vm497, %v494, %v498
      %500 = vst [vmem:[#allocation3] sm:$0xff] %v499
      %vm501 = vcmask 1040384
      %vm502 = vmand %vm501, %vm304
      %v503 = vld [vmem:[#allocation3] sm:$0x1]
      %v504 = vsel %vm502, 0, %v503
      %505 = vst [vmem:[#allocation3] sm:$0x1] %v504
      %v506 = vrot.slane %v492, 1
      %v507 = vor.u32 %v489, %v506
      %vm509 = vmand %vm496, %vm312
      %v510 = vld [vmem:[#allocation3 + $0x10] sm:$0xff]
      %v511 = vsel %vm509, %v507, %v510
      %512 = vst [vmem:[#allocation3 + $0x10] sm:$0xff] %v511
      %vm513 = vcmask 1047559
      %vm514 = vmand %vm513, %vm318
      %v515 = vld [vmem:[#allocation3 + $0x10] sm:$0x80]
      %v516 = vsel %vm514, 0, %v515
      %517 = vst [vmem:[#allocation3 + $0x10] sm:$0x80] %v516
      %v518 = vld [vmem:[#allocation3] sm:$0xff]
      %v519 = vld [vmem:[#allocation3 + $0x8] sm:$0xff]
      %v520 = vld [vmem:[#allocation3 + $0x10] sm:$0xff]
      %v521 = vld [vmem:[%s4] sm:$0xf]
      %v522 = vld [vmem:[%s4 + $0x4] sm:$0xf]
      %v523 = vld [vmem:[%s4 + $0x8] sm:$0xf]
      %v524 = vld [vmem:[%s4 + $0xc] sm:$0xf]
      %v525 = vld [vmem:[%s4 + $0x10] sm:$0xf]
      %v526 = vld [vmem:[%s4 + $0x14] sm:$0xf]
      %v527 = vld [vmem:[%s4 + $0x18] sm:$0xf]
      %v528 = vld [vmem:[%s4 + $0x1c] sm:$0xf]
      %v529 = vld [vmem:[%s4 + $0x20] sm:$0xf]
      %v530 = vld [vmem:[%s4 + $0x24] sm:$0xf]
      %v531 = vld [vmem:[%s4 + $0x28] sm:$0xf]
      %v532 = vld [vmem:[%s4 + $0x2c] sm:$0xf]
      %v533 = vld [vmem:[%s4 + $0x30] sm:$0xf]
      %v534 = vld [vmem:[%s4 + $0x34] sm:$0xf]
      %v535 = vld [vmem:[%s4 + $0x38] sm:$0xf]
      %v536 = vld [vmem:[%s4 + $0x3c] sm:$0xf]
      %v537 = vld [vmem:[%s4 + $0x40] sm:$0xf]
      %v538 = vld [vmem:[%s4 + $0x44] sm:$0xf]
      %v539 = vld [vmem:[%s4 + $0x48] sm:$0xf]
      %v540 = vld [vmem:[%s4 + $0x4c] sm:$0xf]
      %v541 = vld [vmem:[%s4 + $0x50] sm:$0xf]
      %v542 = vld [vmem:[%s4 + $0x54] sm:$0xf]
      %v543 = vld [vmem:[%s4 + $0x58] sm:$0xf]
      %v544 = vld [vmem:[%s4 + $0x5c] sm:$0xf]
      %v545 = vld [vmem:[%s4 + $0x60] sm:$0xf]
      %v546 = vld [vmem:[%s4 + $0x64] sm:$0xf]
      %v547 = vld [vmem:[%s4 + $0x68] sm:$0xf]
      %v548 = vld [vmem:[%s4 + $0x6c] sm:$0xf]
      %v549 = vld [vmem:[%s4 + $0x70] sm:$0xf]
      %v550 = vld [vmem:[%s4 + $0x74] sm:$0xf]
      %v551 = vld [vmem:[%s4 + $0x78] sm:$0xf]
      %v552 = vld [vmem:[%s4 + $0x7c] sm:$0xf]
      %v553 = vld [vmem:[%s4 + $0x80] sm:$0xf]
      %v554 = vld [vmem:[%s4 + $0x84] sm:$0xf]
      %v555 = vld [vmem:[%s4 + $0x88] sm:$0xf]
      %v556 = vld [vmem:[%s4 + $0x8c] sm:$0xf]
      %v557 = vld [vmem:[%s4 + $0x90] sm:$0xf]
      %v558 = vld [vmem:[%s4 + $0x94] sm:$0xf]
      %v559 = vld [vmem:[%s4 + $0x98] sm:$0xf]
      %v560 = vld [vmem:[%s4 + $0x9c] sm:$0xf]
      %v561 = vld [vmem:[%s4 + $0xa0] sm:$0xf]
      %v562 = vld [vmem:[%s4 + $0xa4] sm:$0xf]
      %v563 = vld [vmem:[%s4 + $0xa8] sm:$0xf]
      %v564 = vld [vmem:[%s4 + $0xac] sm:$0xf]
      %v565 = vld [vmem:[%s4 + $0xb0] sm:$0xf]
      %v566 = vld [vmem:[%s4 + $0xb4] sm:$0xf]
      %v567 = vld [vmem:[%s4 + $0xb8] sm:$0xf]
      %v568 = vld [vmem:[%s4 + $0xbc] sm:$0xf]
      %v617 = vunpack.c.l.b16 %v521
      %v618 = vunpack.c.l.b16 %v522
      %v619 = vunpack.c.l.b16 %v523
      %v620 = vunpack.c.l.b16 %v524
      %v621 = vunpack.c.l.b16 %v525
      %v622 = vunpack.c.l.b16 %v526
      %v623 = vunpack.c.l.b16 %v527
      %v624 = vunpack.c.l.b16 %v528
      %v625 = vunpack.c.l.b16 %v529
      %v626 = vunpack.c.l.b16 %v530
      %v627 = vunpack.c.l.b16 %v531
      %v628 = vunpack.c.l.b16 %v532
      %v629 = vunpack.c.l.b16 %v533
      %v630 = vunpack.c.l.b16 %v534
      %v631 = vunpack.c.l.b16 %v535
      %v632 = vunpack.c.l.b16 %v536
      %v633 = vunpack.c.l.b16 %v537
      %v634 = vunpack.c.l.b16 %v538
      %v635 = vunpack.c.l.b16 %v539
      %v636 = vunpack.c.l.b16 %v540
      %v637 = vunpack.c.l.b16 %v541
      %v638 = vunpack.c.l.b16 %v542
      %v639 = vunpack.c.l.b16 %v543
      %v640 = vunpack.c.l.b16 %v544
      %v641 = vunpack.c.l.b16 %v545
      %v642 = vunpack.c.l.b16 %v546
      %v643 = vunpack.c.l.b16 %v547
      %v644 = vunpack.c.l.b16 %v548
      %v645 = vunpack.c.l.b16 %v549
      %v646 = vunpack.c.l.b16 %v550
      %v647 = vunpack.c.l.b16 %v551
      %v648 = vunpack.c.l.b16 %v552
      %v649 = vunpack.c.l.b16 %v553
      %v650 = vunpack.c.l.b16 %v554
      %v651 = vunpack.c.l.b16 %v555
      %v652 = vunpack.c.l.b16 %v556
      %v653 = vunpack.c.l.b16 %v557
      %v654 = vunpack.c.l.b16 %v558
      %v655 = vunpack.c.l.b16 %v559
      %v656 = vunpack.c.l.b16 %v560
      %v657 = vunpack.c.l.b16 %v561
      %v658 = vunpack.c.l.b16 %v562
      %v659 = vunpack.c.l.b16 %v563
      %v660 = vunpack.c.l.b16 %v564
      %v661 = vunpack.c.l.b16 %v565
      %v662 = vunpack.c.l.b16 %v566
      %v663 = vunpack.c.l.b16 %v567
      %v664 = vunpack.c.l.b16 %v568
      %v665 = vpack.c.b16 %v618, %v617
      %v666 = vpack.c.b16 %v620, %v619
      %v667 = vpack.c.b16 %v622, %v621
      %v668 = vpack.c.b16 %v624, %v623
      %v669 = vpack.c.b16 %v626, %v625
      %v670 = vpack.c.b16 %v628, %v627
      %v671 = vpack.c.b16 %v630, %v629
      %v672 = vpack.c.b16 %v632, %v631
      %v673 = vpack.c.b16 %v634, %v633
      %v674 = vpack.c.b16 %v636, %v635
      %v675 = vpack.c.b16 %v638, %v637
      %v676 = vpack.c.b16 %v640, %v639
      %v677 = vpack.c.b16 %v642, %v641
      %v678 = vpack.c.b16 %v644, %v643
      %v679 = vpack.c.b16 %v646, %v645
      %v680 = vpack.c.b16 %v648, %v647
      %v681 = vpack.c.b16 %v650, %v649
      %v682 = vpack.c.b16 %v652, %v651
      %v683 = vpack.c.b16 %v654, %v653
      %v684 = vpack.c.b16 %v656, %v655
      %v685 = vpack.c.b16 %v658, %v657
      %v686 = vpack.c.b16 %v660, %v659
      %v687 = vpack.c.b16 %v662, %v661
      %v688 = vpack.c.b16 %v664, %v663
      %713 = vmatprep.subr.bf16.mxu0 0
      %714 = vmatpush1.bf16.msra.mxu0 %v665
      %715 = vmatprep.subr.bf16.mxu0 0
      %716 = vmatpush1.bf16.msra.mxu0 %v666
      %717 = vmatprep.subr.bf16.mxu0 0
      %718 = vmatpush1.bf16.msra.mxu0 %v667
      %719 = vmatprep.subr.bf16.mxu0 0
      %720 = vmatpush1.bf16.msra.mxu0 %v668
      %721 = vmatprep.subr.bf16.mxu0 0
      %722 = vmatpush1.bf16.msra.mxu0 %v669
      %723 = vmatprep.subr.bf16.mxu0 0
      %724 = vmatpush1.bf16.msra.mxu0 %v670
      %725 = vmatprep.subr.bf16.mxu0 0
      %726 = vmatpush1.bf16.msra.mxu0 %v671
      %727 = vmatprep.subr.bf16.mxu0 0
      %728 = vmatpush1.bf16.msra.mxu0 %v672
      %729 = vmatprep.subr.bf16.mxu0 0
      %730 = vmatpush1.bf16.msra.mxu0 %v673
      %731 = vmatprep.subr.bf16.mxu0 0
      %732 = vmatpush1.bf16.msra.mxu0 %v674
      %733 = vmatprep.subr.bf16.mxu0 0
      %734 = vmatpush1.bf16.msra.mxu0 %v675
      %735 = vmatprep.subr.bf16.mxu0 0
      %736 = vmatpush1.bf16.msra.mxu0 %v676
      %737 = vmatprep.subr.bf16.mxu0 0
      %738 = vmatpush1.bf16.msra.mxu0 %v677
      %739 = vmatprep.subr.bf16.mxu0 0
      %740 = vmatpush1.bf16.msra.mxu0 %v678
      %741 = vmatprep.subr.bf16.mxu0 0
      %742 = vmatpush1.bf16.msra.mxu0 %v679
      %743 = vmatprep.subr.bf16.mxu0 0
      %744 = vmatpush1.bf16.msra.mxu0 %v680
      %745 = vmatprep.mubr.bf16.mxu0 %v519
      %746 = vmatmul.mubr.bf16.gmra.mrb[0].mxu0 %v518
      %v747 = vpop.f32.mrb[0].mxu0
      %v748 = vadd.f32 0.0, %v747
      %v749 = vpop.f32.mrb[0].mxu0
      %v750 = vpop.f32.mrb[0].mxu0
      %v751 = vadd.f32 0.0, %v750
      %v752 = vpop.f32.mrb[0].mxu0
      %753 = vdwg.mxu0
      %754 = vmatprep.subr.bf16.mxu0 0
      %755 = vmatpush1.bf16.msra.mxu0 %v681
      %756 = vmatprep.subr.bf16.mxu0 0
      %757 = vmatpush1.bf16.msra.mxu0 %v682
      %758 = vmatprep.subr.bf16.mxu0 0
      %759 = vmatpush1.bf16.msra.mxu0 %v683
      %760 = vmatprep.subr.bf16.mxu0 0
      %761 = vmatpush1.bf16.msra.mxu0 %v684
      %762 = vmatprep.subr.bf16.mxu0 0
      %763 = vmatpush1.bf16.msra.mxu0 %v685
      %764 = vmatprep.subr.bf16.mxu0 0
      %765 = vmatpush1.bf16.msra.mxu0 %v686
      %766 = vmatprep.subr.bf16.mxu0 0
      %767 = vmatpush1.bf16.msra.mxu0 %v687
      %768 = vmatprep.subr.bf16.mxu0 0
      %769 = vmatpush1.bf16.msra.mxu0 %v688
      %770 = vmatprep.subr.bf16.mxu0 0
      %771 = vmatpush1.bf16.msra.mxu0 0
      %772 = vmatprep.subr.bf16.mxu0 0
      %773 = vmatpush1.bf16.msra.mxu0 0
      %774 = vmatprep.subr.bf16.mxu0 0
      %775 = vmatpush1.bf16.msra.mxu0 0
      %776 = vmatprep.subr.bf16.mxu0 0
      %777 = vmatpush1.bf16.msra.mxu0 0
      %778 = vmatprep.subr.bf16.mxu0 0
      %779 = vmatpush1.bf16.msra.mxu0 0
      %780 = vmatprep.subr.bf16.mxu0 0
      %781 = vmatpush1.bf16.msra.mxu0 0
      %782 = vmatprep.subr.bf16.mxu0 0
      %783 = vmatpush1.bf16.msra.mxu0 0
      %784 = vmatprep.subr.bf16.mxu0 0
      %785 = vmatpush1.bf16.msra.mxu0 0
      %786 = vmatprep.mubr.bf16.mxu0 0
      %787 = vmatmul.mubr.bf16.gmra.mrb[0].mxu0 %v520
      %v788 = vpop.f32.mrb[0].mxu0
      %v789 = vadd.f32 %v748, %v788
      %v790 = vpop.f32.mrb[0].mxu0
      %v791 = vpop.f32.mrb[0].mxu0
      %v792 = vadd.f32 %v751, %v791
      %v793 = vpop.f32.mrb[0].mxu0
      %794 = vdwg.mxu0
      %v795 = vld [vmem:[%s5] sm:$0x1]
      %v797 = vlaneseq
      %v798 = vshrl.u32 %v797, 7
      %v799 = vsub.s32 0, %v798
      %v800 = vrot.slane %v795, %v799
      %v802 = vmul.f32 %v789, %v800
      %v803 = vmul.f32 %v792, %v800
      %v804 = vld [vmem:[%s6] sm:$0x1]
      %v806 = vlaneseq
      %v807 = vshrl.u32 %v806, 7
      %v808 = vsub.s32 0, %v807
      %v809 = vrot.slane %v804, %v808
      %v811 = vadd.f32 %v802, %v809
      %v812 = vadd.f32 %v803, %v809
      %v813 = vmax.f32 %v811, 0.0
      %v814 = vmax.f32 %v812, 0.0
      %v815 = vpack.c.bf16 %v814, %v813
      %v817 = vunpack.c.l.b16 %v815
      %v818 = vunpack.c.h.b16 %v815
      %v819 = vpack.c.b16 %v817, %v817
      %v820 = vpack.c.b16 %v818, %v818
      %823 = vst [vmem:[%s278] sm:$0xf] %v819
      %824 = vst [vmem:[%s278 + $0x4] sm:$0xf] %v820
      %p825 = scmp.lt.s32.totalorder %s18, 1
      %s826 = scalar_select %p825, %s18, 1
      %s827 = smul.addr %s826, 2
      %s828 = smul.addr %s827, 4
      %s829 = scalar_lea.vmem %s7, %s828
      // Predicated region
      $region49: #{decoder_forward.1} parent=47 // pred_check
        %p830 = pneg %p188
      $region50: #{decoder_forward.1} parent=47 // pred_check_branch
        %832 = sbr.rel (%p830) target = $region52
      $region51: #{decoder_forward.1} parent=47 // pred_region
        _
      $region52: #{decoder_forward.1} parent=47 // pred_fallthru
        _
    $region48: #{decoder_forward.1} parent=5 // pred_fallthru
      _
    %p833 = scmp.le.s32.totalorder 2, %s13
    // Predicated region
    $region53: #{decoder_forward.1} parent=5 // pred_check
      %p834 = pneg %p833
    $region54: #{decoder_forward.1} parent=5 // pred_check_branch
      %836 = sbr.rel (%p834) target = $region56
    $region55: #{decoder_forward.1} parent=5 // pred_region
      %s837 = ssub.s32 %s13, 2
      // Predicated region
      $region57: #{decoder_forward.1} parent=55 // pred_check
        %p838 = pneg %p194
      $region58: #{decoder_forward.1} parent=55 // pred_check_branch
        %840 = sbr.rel (%p838) target = $region60
      $region59: #{decoder_forward.1} parent=55 // pred_region
        %p841 = scmp.lt.s32.totalorder %s19, 1
        %s842 = scalar_select %p841, %s19, 1
        %s843 = smul.addr %s842, 2
        %s844 = smul.addr %s843, 4
        %s845 = scalar_lea.vmem %s7, %s844
      $region60: #{decoder_forward.1} parent=55 // pred_fallthru
        _
    $region56: #{decoder_forward.1} parent=5 // pred_fallthru
      _
  $region6: #{decoder_forward.1} parent=0 // loop_footer
    %s17 = sadd.s32 1, %s13
  $region7: #{decoder_forward.1} parent=0 // loop_footer_branch
    %12 = sbr.rel target = $region3
  $region8: #{decoder_forward.1} parent=0 // loop_exit
    _

</llo_original>
